<compile_context>
chip_gen: v6e
topology: v6e:2x2x1
jax: 0.10.0
libtpu: 0.0.40
codegen_flags: <defaults>
</compile_context>

<pallas_src>
import functools

import jax
import jax.numpy as jnp
from jax.experimental import pallas as pl
from jax.experimental.pallas import tpu as pltpu


def _round_up(n, m):
    return -(-n // m) * m


def _pick_row_block(H, W, target_lanes=1024):
    """Row-block height TH dividing H.  Prefer TH*W a multiple of 256 (v6e/v7x MXU
    width), fall back to 128, so each grid step feeds the MXU several vreg widths of
    lanes and the tap-construction preamble is amortized."""
    divisors = [t for t in range(1, H + 1) if H % t == 0]
    for mult in (256, 128):
        cand = [t for t in divisors if (t * W) % mult == 0 and t * W <= target_lanes]
        if cand:
            return max(cand)
    return H  # whole image: a full-extent block is always a legal BlockSpec


def _padded_tile_bytes(shape, dtype):
    """VMEM bytes of a tile after (sublane, lane) padding."""
    bpe = jnp.dtype(dtype).itemsize
    sub = {4: 8, 2: 16, 1: 32}.get(bpe, 8)
    dims = list(shape)
    if dims:
        dims[-1] = _round_up(dims[-1], 128)
    if len(dims) >= 2:
        dims[-2] = _round_up(dims[-2], sub)
    n = 1
    for d in dims:
        n *= d
    return n * bpe


def _vmem_capacity_bytes():
    try:
        cap = getattr(pltpu.get_tpu_info(), "vmem_capacity_bytes", None)
        if cap:
            return int(cap)
    except Exception:
        pass
    return 64 << 20  # conservative default (v7x per-core VMEM)


def _fused_mbconv_kernel(xp_ref, w1_ref, b1_ref, w2_ref, b2_ref, o_ref, *,
                         TH, W, Cout, NR):
    # xp_ref: (1, Cin_p, Lp)      lane-dense padded image (top/bottom zero rows only),
    #                             flattened spatial p = row*W + col; constant in r.
    # w1_ref: (Cmid_p, 9*Cin_p)   BN1-folded 3x3 weights, k = (kh*3 + kw)*Cin_p + ci
    # b1_ref: (Cmid_p, 1)         BN1-folded bias (f32)
    # w2_ref: (Cout_p, Cmid_p)    BN2-folded 1x1 weights
    # b2_ref: (Cout_p, 1)         BN2-folded bias (f32)
    # o_ref : (1, Cout, TH*W)     output row-block, flattened spatial on the lane axis
    P = TH * W
    if NR == 1:
        strip = xp_ref[0]                                     # (Cin_p, Lp)
    else:
        r = pl.program_id(1)
        start = pl.multiple_of(r * P, 128)                    # P % 128 == 0 when NR > 1
        strip = xp_ref[0, :, pl.ds(start, (TH + 2) * W)]      # halo strip, single read
    S = strip.shape[-1]

    # Column (x) index of every output lane; masks for the taps that read across the
    # (absent) left/right zero pad.
    col = jax.lax.broadcasted_iota(jnp.int32, (1, P), 1) % W
    not_left = col > 0             # tap kw==0 reads column x-1 -> invalid at x==0
    not_right = col < (W - 1)      # tap kw==2 reads column x+1 -> invalid at x==W-1
    zero = jnp.zeros((), strip.dtype)

    # 9 lane-dense taps via XLU rolls.  Any rotation wrap-around or cross-row bleed
    # lands exactly on a masked lane, so the result equals the zero-padded conv input.
    taps = []
    for kh in range(3):
        for kw in range(3):
            s = kh * W + (kw - 1)
            t = pltpu.roll(strip, (-s) % S, axis=1) if s else strip
            t = t[:, :P]
            if kw == 0:
                t = jnp.where(not_left, t, zero)
            elif kw == 2:
                t = jnp.where(not_right, t, zero)
            taps.append(t)
    patches = jnp.concatenate(taps, axis=0)                   # (9*Cin_p, P), vreg stack

    # 3x3 conv (+ folded BN1) as a single MXU push with K = 9*Cin_p, N = TH*W.
    h = jnp.dot(w1_ref[...], patches, preferred_element_type=jnp.float32)
    h = jnp.clip(h + b1_ref[...], 0.0, 6.0)                   # bias + ReLU6 in f32

    # 1x1 point conv (+ folded BN2); the Cmid intermediate never leaves VMEM/vregs.
    y = jnp.dot(w2_ref[...], h.astype(w2_ref.dtype), preferred_element_type=jnp.float32)
    y = y + b2_ref[...]
    o_ref[0] = y[:Cout].astype(o_ref.dtype)                   # lane-dense store


def fused_mbconv_forward(x, w_spatial, bn1, w_point, bn2, *, eps=1e-5,
                         compute_dtype=None, target_lanes=1024):
    """FusedMBConv forward (inference-mode BN), NCHW in / NCHW out.

    compute_dtype: optional matmul operand dtype (e.g. jnp.bfloat16 on v6e/v7x to halve
                   DMA bytes and hit the bf16 MXU rate; accumulation stays float32).
    """
    B, Cin, H, W = x.shape
    Cmid = w_spatial.shape[0]
    Cout = w_point.shape[0]
    assert w_spatial.shape == (Cmid, Cin, 3, 3)
    assert w_point.shape == (Cout, Cmid, 1, 1)

    cd = jnp.dtype(compute_dtype) if compute_dtype is not None else jnp.dtype(x.dtype)
    sub = {4: 8, 2: 16, 1: 32}.get(cd.itemsize, 8)
    Cin_p, Cmid_p, Cout_p = (_round_up(c, sub) for c in (Cin, Cmid, Cout))

    g1, be1, m1, v1 = bn1
    g2, be2, m2, v2 = bn2
    s1 = g1 * jax.lax.rsqrt(v1 + eps)
    s2 = g2 * jax.lax.rsqrt(v2 + eps)

    # Fold inference-mode BatchNorm into the conv weights / biases; pad channel dims to
    # full sublane groups so every in-kernel vector op works on whole vregs.
    w1f = w_spatial * s1[:, None, None, None]                       # (Cmid, Cin, 3, 3)
    w1p = jnp.pad(w1f, ((0, Cmid_p - Cmid), (0, Cin_p - Cin), (0, 0), (0, 0)))
    w1m = jnp.transpose(w1p, (0, 2, 3, 1)).reshape(Cmid_p, 9 * Cin_p).astype(cd)
    b1m = jnp.pad(be1 - m1 * s1, (0, Cmid_p - Cmid)).reshape(Cmid_p, 1).astype(jnp.float32)
    w2f = w_point[:, :, 0, 0] * s2[:, None]                         # (Cout, Cmid)
    w2m = jnp.pad(w2f, ((0, Cout_p - Cout), (0, Cmid_p - Cmid))).astype(cd)
    b2m = jnp.pad(be2 - m2 * s2, (0, Cout_p - Cout)).reshape(Cout_p, 1).astype(jnp.float32)

    # Lane-dense padded image: zero rows top/bottom only, channels padded to Cin_p,
    # flattened spatial on the lane axis, lane length rounded up to a vreg multiple.
    L = (H + 2) * W
    Lp = _round_up(L, 128)
    xp = jnp.pad(x.astype(cd), ((0, 0), (0, Cin_p - Cin), (1, 1), (0, 0)))
    xp = xp.reshape(B, Cin_p, L)
    if Lp != L:
        xp = jnp.pad(xp, ((0, 0), (0, 0), (0, Lp - L)))

    TH = _pick_row_block(H, W, target_lanes)
    NR = H // TH
    P = TH * W

    kernel = functools.partial(_fused_mbconv_kernel, TH=TH, W=W, Cout=Cout, NR=NR)

    # Generation-aware VMEM budget from tile-padded sizes (pipeline double-buffers the
    # BlockSpec inputs/outputs); capped at ~75% of physical VMEM.
    dbuf = (_padded_tile_bytes((Cin_p, Lp), cd)
            + _padded_tile_bytes((Cmid_p, 9 * Cin_p), cd)
            + _padded_tile_bytes((Cmid_p, 1), jnp.float32)
            + _padded_tile_bytes((Cout_p, Cmid_p), cd)
            + _padded_tile_bytes((Cout_p, 1), jnp.float32)
            + _padded_tile_bytes((Cout, P), x.dtype))
    live = (_padded_tile_bytes((Cin_p, (TH + 2) * W), cd)           # halo strip
            + _padded_tile_bytes((9 * Cin_p, P), cd)                # patches
            + _padded_tile_bytes((Cmid_p, P), jnp.float32)          # h
            + _padded_tile_bytes((Cout_p, P), jnp.float32))         # y
    vmem_est = 2 * dbuf + live + (4 << 20)
    vmem_limit = int(min(_vmem_capacity_bytes() * 3 // 4, max(vmem_est, 32 << 20)))
    # TODO(synk): for very large H*W*Cin (vmem_est above ~3/4 of VMEM, esp. v7x's
    # 64 MiB), switch xp to memory_space=pl.ANY and manually double-buffer only a
    # (Cin_p, (TH+2)*W) strip per row block with make_async_copy + DMA semaphores.

    out_flat = pl.pallas_call(
        kernel,
        out_shape=jax.ShapeDtypeStruct((B, Cout, H * W), x.dtype),
        grid_spec=pltpu.PrefetchScalarGridSpec(
            num_scalar_prefetch=0,
            grid=(B, NR),
            in_specs=[
                # whole padded image of batch b; constant in r -> DMA'd once per batch
                # and revisited across row blocks.
                pl.BlockSpec((1, Cin_p, Lp), lambda b, r: (b, 0, 0)),
                pl.BlockSpec((Cmid_p, 9 * Cin_p), lambda b, r: (0, 0)),
                pl.BlockSpec((Cmid_p, 1), lambda b, r: (0, 0)),
                pl.BlockSpec((Cout_p, Cmid_p), lambda b, r: (0, 0)),
                pl.BlockSpec((Cout_p, 1), lambda b, r: (0, 0)),
            ],
            out_specs=pl.BlockSpec((1, Cout, P), lambda b, r: (b, 0, r)),
        ),
        compiler_params=pltpu.CompilerParams(
            # Batch is the megacore-sharded axis (v7x: one image per core); the row
            # axis revisits the same xp buffer, so keep it "arbitrary".
            dimension_semantics=("parallel", "arbitrary"),
            vmem_limit_bytes=vmem_limit),
    )(xp, w1m, b1m, w2m, b2m)

    # (B, Cout, H*W) -> (B, Cout, H, W): contiguous reshape, no extra HBM pass.
    return out_flat.reshape(B, Cout, H, W)


def _reference(x, w_spatial, bn1, w_point, bn2, eps=1e-5):
    """Pure-JAX FusedMBConv forward (inference-mode BN), NCHW."""
    def bn(h, p):
        g, b, m, v = p
        s = g * jax.lax.rsqrt(v + eps)
        return (h - m[None, :, None, None]) * s[None, :, None, None] + b[None, :, None, None]

    h = jax.lax.conv_general_dilated(
        x, w_spatial, window_strides=(1, 1), padding="SAME",
        dimension_numbers=("NCHW", "OIHW", "NCHW"))
    h = jnp.clip(bn(h, bn1), 0.0, 6.0)   # ReLU6
    y = jax.lax.conv_general_dilated(
        h, w_point, window_strides=(1, 1), padding="VALID",
        dimension_numbers=("NCHW", "OIHW", "NCHW"))
    return bn(y, bn2)


if __name__ == "__main__":
    key = jax.random.PRNGKey(0)
    ks = jax.random.split(key, 11)

    B, Cin, H, W = 2, 4, 16, 16
    expand_ratio = 6
    Cmid = Cin * expand_ratio        # 24
    Cout = 4

    x = jax.random.normal(ks[0], (B, Cin, H, W), dtype=jnp.float32)
    w_spatial = jax.random.normal(ks[1], (Cmid, Cin, 3, 3), dtype=jnp.float32) * 0.2
    w_point = jax.random.normal(ks[2], (Cout, Cmid, 1, 1), dtype=jnp.float32) * 0.2
    bn1 = (jax.random.uniform(ks[3], (Cmid,), jnp.float32, 0.5, 1.5),   # gamma
           0.1 * jax.random.normal(ks[4], (Cmid,), jnp.float32),        # beta
           0.1 * jax.random.normal(ks[5], (Cmid,), jnp.float32),        # running_mean
           jax.random.uniform(ks[6], (Cmid,), jnp.float32, 0.5, 1.5))   # running_var
    bn2 = (jax.random.uniform(ks[7], (Cout,), jnp.float32, 0.5, 1.5),
           0.1 * jax.random.normal(ks[8], (Cout,), jnp.float32),
           0.1 * jax.random.normal(ks[9], (Cout,), jnp.float32),
           jax.random.uniform(ks[10], (Cout,), jnp.float32, 0.5, 1.5))

    out = fused_mbconv_forward(x, w_spatial, bn1, w_point, bn2)
    out = jax.block_until_ready(out)

    ref = _reference(x, w_spatial, bn1, w_point, bn2)
    assert out.shape == (B, Cout, H, W)
    assert jnp.allclose(out, ref, atol=1e-3, rtol=1e-3), \
        float(jnp.max(jnp.abs(out - ref)))

    print("KERNEL_OK")
</pallas_src>

<mosaic_0001>
module attributes {stable_mosaic.version = 11 : i64} {
  func.func @_fused_mbconv_kernel(%arg0: i32, %arg1: i32, %arg2: memref<1x8x384xf32, #tpu.memory_space<vmem>>, %arg3: memref<24x72xf32, #tpu.memory_space<vmem>>, %arg4: memref<24x1xf32, #tpu.memory_space<vmem>>, %arg5: memref<8x24xf32, #tpu.memory_space<vmem>>, %arg6: memref<8x1xf32, #tpu.memory_space<vmem>>, %arg7: memref<1x4x256xf32, #tpu.memory_space<vmem>>) attributes {dimension_semantics = [#tpu.dimension_semantics<parallel>, #tpu.dimension_semantics<arbitrary>], iteration_bounds = array<i64: 2, 1>, scalar_prefetch = 0 : i64, scratch_operands = 0 : i64, tpu.core_type = #tpu.core_type<tc>, window_params = [{transform_indices = @transform_0, window_bounds = array<i64: 1, 8, 384>}, {pipeline_mode = #tpu.pipeline_mode<synchronous>, transform_indices = @transform_1, window_bounds = array<i64: 24, 72>}, {pipeline_mode = #tpu.pipeline_mode<synchronous>, transform_indices = @transform_2, window_bounds = array<i64: 24, 1>}, {pipeline_mode = #tpu.pipeline_mode<synchronous>, transform_indices = @transform_3, window_bounds = array<i64: 8, 24>}, {pipeline_mode = #tpu.pipeline_mode<synchronous>, transform_indices = @transform_4, window_bounds = array<i64: 8, 1>}, {transform_indices = @transform_5, window_bounds = array<i64: 1, 4, 256>}]} {
    %c0 = arith.constant 0 : index
    %c0_0 = arith.constant 0 : index
    %c0_1 = arith.constant 0 : index
    %0 = vector.load %arg2[%c0, %c0_0, %c0_1] : memref<1x8x384xf32, #tpu.memory_space<vmem>>, vector<1x8x384xf32>
    %1 = vector.shape_cast %0 : vector<1x8x384xf32> to vector<8x384xf32>
    %2 = tpu.iota {dimensions = array<i32: 1>} : vector<1x256xi32>
    %c16_i32 = arith.constant 16 : i32
    %c0_i32 = arith.constant 0 : i32
    %3 = arith.cmpi eq, %c16_i32, %c0_i32 : i32
    %c1_i32 = arith.constant 1 : i32
    %4 = arith.select %3, %c1_i32, %c16_i32 : i32
    %5 = vector.broadcast %4 : i32 to vector<1x256xi32>
    %6 = arith.remsi %2, %5 : vector<1x256xi32>
    %c0_i32_2 = arith.constant 0 : i32
    %7 = vector.broadcast %c0_i32_2 : i32 to vector<1x256xi32>
    %8 = arith.cmpi ne, %6, %7 : vector<1x256xi32>
    %c0_i32_3 = arith.constant 0 : i32
    %9 = vector.broadcast %c0_i32_3 : i32 to vector<1x256xi32>
    %10 = arith.cmpi slt, %6, %9 : vector<1x256xi32>
    %c0_i32_4 = arith.constant 0 : i32
    %11 = arith.cmpi slt, %4, %c0_i32_4 : i32
    %12 = vector.broadcast %11 : i1 to vector<1x256xi1>
    %13 = vector.broadcast %12 : vector<1x256xi1> to vector<1x256xi1>
    %14 = arith.xori %10, %13 : vector<1x256xi1>
    %15 = arith.andi %14, %8 : vector<1x256xi1>
    %16 = vector.broadcast %4 : i32 to vector<1x256xi32>
    %17 = arith.addi %6, %16 : vector<1x256xi32>
    %18 = arith.select %15, %17, %6 : vector<1x256xi1>, vector<1x256xi32>
    %c0_i32_5 = arith.constant 0 : i32
    %19 = vector.broadcast %c0_i32_5 : i32 to vector<1x256xi32>
    %20 = arith.cmpi sgt, %18, %19 : vector<1x256xi32>
    %c15_i32 = arith.constant 15 : i32
    %21 = vector.broadcast %c15_i32 : i32 to vector<1x256xi32>
    %22 = arith.cmpi slt, %18, %21 : vector<1x256xi32>
    %c1_i32_6 = arith.constant 1 : i32
    %23 = tpu.dynamic_rotate %1 by %c1_i32_6 dim 1 : vector<8x384xf32>, i32 -> vector<8x384xf32>
    %24 = vector.extract_strided_slice %23 {offsets = [0, 0], sizes = [8, 256], strides = [1, 1]} : vector<8x384xf32> to vector<8x256xf32>
    %cst = arith.constant 0.000000e+00 : f32
    %25 = vector.shape_cast %20 : vector<1x256xi1> to vector<1x256xi1>
    %26 = vector.broadcast %25 : vector<1x256xi1> to vector<8x256xi1>
    %27 = vector.broadcast %cst : f32 to vector<8x256xf32>
    %28 = arith.select %26, %24, %27 : vector<8x256xi1>, vector<8x256xf32>
    %29 = vector.extract_strided_slice %1 {offsets = [0, 0], sizes = [8, 256], strides = [1, 1]} : vector<8x384xf32> to vector<8x256xf32>
    %c383_i32 = arith.constant 383 : i32
    %30 = tpu.dynamic_rotate %1 by %c383_i32 dim 1 : vector<8x384xf32>, i32 -> vector<8x384xf32>
    %31 = vector.extract_strided_slice %30 {offsets = [0, 0], sizes = [8, 256], strides = [1, 1]} : vector<8x384xf32> to vector<8x256xf32>
    %cst_7 = arith.constant 0.000000e+00 : f32
    %32 = vector.shape_cast %22 : vector<1x256xi1> to vector<1x256xi1>
    %33 = vector.broadcast %32 : vector<1x256xi1> to vector<8x256xi1>
    %34 = vector.broadcast %cst_7 : f32 to vector<8x256xf32>
    %35 = arith.select %33, %31, %34 : vector<8x256xi1>, vector<8x256xf32>
    %c369_i32 = arith.constant 369 : i32
    %36 = tpu.dynamic_rotate %1 by %c369_i32 dim 1 : vector<8x384xf32>, i32 -> vector<8x384xf32>
    %37 = vector.extract_strided_slice %36 {offsets = [0, 0], sizes = [8, 256], strides = [1, 1]} : vector<8x384xf32> to vector<8x256xf32>
    %cst_8 = arith.constant 0.000000e+00 : f32
    %38 = vector.shape_cast %20 : vector<1x256xi1> to vector<1x256xi1>
    %39 = vector.broadcast %38 : vector<1x256xi1> to vector<8x256xi1>
    %40 = vector.broadcast %cst_8 : f32 to vector<8x256xf32>
    %41 = arith.select %39, %37, %40 : vector<8x256xi1>, vector<8x256xf32>
    %c368_i32 = arith.constant 368 : i32
    %42 = tpu.dynamic_rotate %1 by %c368_i32 dim 1 : vector<8x384xf32>, i32 -> vector<8x384xf32>
    %43 = vector.extract_strided_slice %42 {offsets = [0, 0], sizes = [8, 256], strides = [1, 1]} : vector<8x384xf32> to vector<8x256xf32>
    %c367_i32 = arith.constant 367 : i32
    %44 = tpu.dynamic_rotate %1 by %c367_i32 dim 1 : vector<8x384xf32>, i32 -> vector<8x384xf32>
    %45 = vector.extract_strided_slice %44 {offsets = [0, 0], sizes = [8, 256], strides = [1, 1]} : vector<8x384xf32> to vector<8x256xf32>
    %cst_9 = arith.constant 0.000000e+00 : f32
    %46 = vector.shape_cast %22 : vector<1x256xi1> to vector<1x256xi1>
    %47 = vector.broadcast %46 : vector<1x256xi1> to vector<8x256xi1>
    %48 = vector.broadcast %cst_9 : f32 to vector<8x256xf32>
    %49 = arith.select %47, %45, %48 : vector<8x256xi1>, vector<8x256xf32>
    %c353_i32 = arith.constant 353 : i32
    %50 = tpu.dynamic_rotate %1 by %c353_i32 dim 1 : vector<8x384xf32>, i32 -> vector<8x384xf32>
    %51 = vector.extract_strided_slice %50 {offsets = [0, 0], sizes = [8, 256], strides = [1, 1]} : vector<8x384xf32> to vector<8x256xf32>
    %cst_10 = arith.constant 0.000000e+00 : f32
    %52 = vector.shape_cast %20 : vector<1x256xi1> to vector<1x256xi1>
    %53 = vector.broadcast %52 : vector<1x256xi1> to vector<8x256xi1>
    %54 = vector.broadcast %cst_10 : f32 to vector<8x256xf32>
    %55 = arith.select %53, %51, %54 : vector<8x256xi1>, vector<8x256xf32>
    %c352_i32 = arith.constant 352 : i32
    %56 = tpu.dynamic_rotate %1 by %c352_i32 dim 1 : vector<8x384xf32>, i32 -> vector<8x384xf32>
    %57 = vector.extract_strided_slice %56 {offsets = [0, 0], sizes = [8, 256], strides = [1, 1]} : vector<8x384xf32> to vector<8x256xf32>
    %c351_i32 = arith.constant 351 : i32
    %58 = tpu.dynamic_rotate %1 by %c351_i32 dim 1 : vector<8x384xf32>, i32 -> vector<8x384xf32>
    %59 = vector.extract_strided_slice %58 {offsets = [0, 0], sizes = [8, 256], strides = [1, 1]} : vector<8x384xf32> to vector<8x256xf32>
    %cst_11 = arith.constant 0.000000e+00 : f32
    %60 = vector.shape_cast %22 : vector<1x256xi1> to vector<1x256xi1>
    %61 = vector.broadcast %60 : vector<1x256xi1> to vector<8x256xi1>
    %62 = vector.broadcast %cst_11 : f32 to vector<8x256xf32>
    %63 = arith.select %61, %59, %62 : vector<8x256xi1>, vector<8x256xf32>
    %64 = tpu.concatenate %28, %29, %35, %41, %43, %49, %55, %57, %63 in 0 : vector<8x256xf32>, vector<8x256xf32>, vector<8x256xf32>, vector<8x256xf32>, vector<8x256xf32>, vector<8x256xf32>, vector<8x256xf32>, vector<8x256xf32>, vector<8x256xf32> -> vector<72x256xf32>
    %c0_12 = arith.constant 0 : index
    %c0_13 = arith.constant 0 : index
    %65 = vector.load %arg3[%c0_12, %c0_13] : memref<24x72xf32, #tpu.memory_space<vmem>>, vector<24x72xf32>
    %cst_14 = arith.constant dense<0.000000e+00> : vector<24x256xf32>
    %66 = tpu.matmul %65, %64, %cst_14 {dimension_numbers = #tpu.dot_dimension_numbers<[1], [0], [0], [1], [0, 0, 1, 1], [], []>} : vector<24x72xf32>, vector<72x256xf32>, vector<24x256xf32> -> vector<24x256xf32>
    %c0_15 = arith.constant 0 : index
    %c0_16 = arith.constant 0 : index
    %67 = vector.load %arg4[%c0_15, %c0_16] : memref<24x1xf32, #tpu.memory_space<vmem>>, vector<24x1xf32>
    %68 = vector.broadcast %67 : vector<24x1xf32> to vector<24x256xf32>
    %69 = arith.addf %66, %68 : vector<24x256xf32>
    %cst_17 = arith.constant 0.000000e+00 : f32
    %cst_18 = arith.constant 6.000000e+00 : f32
    %70 = vector.broadcast %cst_17 : f32 to vector<24x256xf32>
    %71 = arith.maximumf %70, %69 : vector<24x256xf32>
    %72 = vector.broadcast %cst_18 : f32 to vector<24x256xf32>
    %73 = arith.minimumf %72, %71 : vector<24x256xf32>
    %c0_19 = arith.constant 0 : index
    %c0_20 = arith.constant 0 : index
    %74 = vector.load %arg5[%c0_19, %c0_20] : memref<8x24xf32, #tpu.memory_space<vmem>>, vector<8x24xf32>
    %cst_21 = arith.constant dense<0.000000e+00> : vector<8x256xf32>
    %75 = tpu.matmul %74, %73, %cst_21 {dimension_numbers = #tpu.dot_dimension_numbers<[1], [0], [0], [1], [0, 0, 1, 1], [], []>} : vector<8x24xf32>, vector<24x256xf32>, vector<8x256xf32> -> vector<8x256xf32>
    %c0_22 = arith.constant 0 : index
    %c0_23 = arith.constant 0 : index
    %76 = vector.load %arg6[%c0_22, %c0_23] : memref<8x1xf32, #tpu.memory_space<vmem>>, vector<8x1xf32>
    %77 = vector.broadcast %76 : vector<8x1xf32> to vector<8x256xf32>
    %78 = arith.addf %75, %77 : vector<8x256xf32>
    %79 = vector.extract_strided_slice %78 {offsets = [0, 0], sizes = [4, 256], strides = [1, 1]} : vector<8x256xf32> to vector<4x256xf32>
    %c0_24 = arith.constant 0 : index
    %c0_25 = arith.constant 0 : index
    %c0_26 = arith.constant 0 : index
    %80 = vector.load %arg7[%c0_24, %c0_25, %c0_26] : memref<1x4x256xf32, #tpu.memory_space<vmem>>, vector<1x4x256xf32>
    %81 = vector.shape_cast %80 : vector<1x4x256xf32> to vector<4x256xf32>
    %82 = vector.shape_cast %79 : vector<4x256xf32> to vector<1x4x256xf32>
    tpu.vector_store %arg7[%c0_24, %c0_25, %c0_26], %82 {strides = array<i32>} : memref<1x4x256xf32, #tpu.memory_space<vmem>>, vector<1x4x256xf32>,
    return
  }
  func.func @transform_0(%arg0: i32, %arg1: i32) -> (i32, i32, i32) {
    %c0_i32 = arith.constant 0 : i32
    %c0_i32_0 = arith.constant 0 : i32
    %c0_i32_1 = arith.constant 0 : i32
    return %arg0, %c0_i32, %c0_i32_0 : i32, i32, i32
  }
  func.func @transform_1(%arg0: i32, %arg1: i32) -> (i32, i32) {
    %c0_i32 = arith.constant 0 : i32
    %c0_i32_0 = arith.constant 0 : i32
    %c0_i32_1 = arith.constant 0 : i32
    return %c0_i32, %c0_i32_0 : i32, i32
  }
  func.func @transform_2(%arg0: i32, %arg1: i32) -> (i32, i32) {
    %c0_i32 = arith.constant 0 : i32
    %c0_i32_0 = arith.constant 0 : i32
    %c0_i32_1 = arith.constant 0 : i32
    return %c0_i32, %c0_i32_0 : i32, i32
  }
  func.func @transform_3(%arg0: i32, %arg1: i32) -> (i32, i32) {
    %c0_i32 = arith.constant 0 : i32
    %c0_i32_0 = arith.constant 0 : i32
    %c0_i32_1 = arith.constant 0 : i32
    return %c0_i32, %c0_i32_0 : i32, i32
  }
  func.func @transform_4(%arg0: i32, %arg1: i32) -> (i32, i32) {
    %c0_i32 = arith.constant 0 : i32
    %c0_i32_0 = arith.constant 0 : i32
    %c0_i32_1 = arith.constant 0 : i32
    return %c0_i32, %c0_i32_0 : i32, i32
  }
  func.func @transform_5(%arg0: i32, %arg1: i32) -> (i32, i32, i32) {
    %c0_i32 = arith.constant 0 : i32
    %c0_i32_0 = arith.constant 0 : i32
    return %arg0, %c0_i32, %arg1 : i32, i32, i32
  }
}

</mosaic_0001>

<llo_original>
// kernel: tpu_custom_call.1
$region0: #{tpu_custom_call.1}
  #allocation0 [shape = 'u32[]', space=smem, size = 0x4, offset = 0x4, fixed_abs, tag = 'smem constant byte address 0x4 - core index']
  #allocation1 [shape = 'u32[144,128]{1,0:T(1,128)}', space=vmem, size = 0x12000, scoped, tag = 'internal scratch']
  %s0 = inlined_call_operand.hbm [shape: f32[2,8,384], index: 0, kind: input, shape index: {}]
  %s1 = inlined_call_operand.vmem [shape: f32[24,72], index: 1, kind: input, shape index: {}]
  %s2 = inlined_call_operand.vmem [shape: f32[24,1], index: 2, kind: input, shape index: {}]
  %s3 = inlined_call_operand.vmem [shape: f32[8,24], index: 3, kind: input, shape index: {}]
  %s4 = inlined_call_operand.vmem [shape: f32[8,1], index: 4, kind: input, shape index: {}]
  %s5 = inlined_call_operand.hbm [shape: f32[2,4,256], index: 5, kind: output, shape index: {}]
  %s6 = sld [smem:[#allocation0]]
  $region57: #{tpu_custom_call.1} parent=0
    _
  %s8 = ssub.s32 1, %s6
  %s9 = scalar_select 0, %s8, %s6
  $region1: #{tpu_custom_call.1} parent=0
    #allocation2 [shape = 'u8[24576]{0}', space=vmem, size = 0x6000, scoped, tag = 'input window, operand 0']
    #allocation3 [shape = 's32[2]{0}', space=sflag, size = 0x8, scoped, tag = 'scoped memory for tpu_custom_call.1']
    #allocation4 [shape = 's32[2]{0}', space=sflag, size = 0x8, scoped, tag = 'scoped memory for tpu_custom_call.1']
    #allocation5 [shape = 'u8[8192]{0}', space=vmem, size = 0x2000, scoped, tag = 'output window, operand 0']
    %10 = vsyncpa [#allocation3], 0
    %s11 = scalar_lea.sflag [#allocation3], 1
    %12 = vsyncpa %s11, 0
    %13 = vsyncpa [#allocation4], 0
    %s14 = scalar_lea.sflag [#allocation4], 1
    %15 = vsyncpa %s14, 0
    loop: start=0, step=1, limit=4
    $region2: #{tpu_custom_call.1} parent=1 // loop_pre_header
      _
    $region3: #{tpu_custom_call.1} parent=1 // loop_header
      %s17 = sphi 0, %s21
      %p18 = scmp.ge.s32.totalorder %s17, 4
      %s24 = sphi 0, %s36
      %s25 = sphi 0, %s32
      %s26 = sphi 0, %s24
      %s27 = sphi 0, %s25
      %s28 = sphi 0, %s26
      %s29 = sphi 0, %s27
      %s39 = sphi 0, %s41
      %s42 = sphi 0, %s39
      %s43 = sphi 0, %s42
      %s59 = sphi 0, %s43
      %s63 = sphi 0, %s63
      %s65 = sphi 0, %s63
      %s66 = sphi 0, %s65
      %s80 = sphi 0, %s66
      %s84 = sphi 0, %s84
      %s86 = sphi 0, %s84
      %s87 = sphi 0, %s86
      %s101 = sphi 0, %s87
      %s105 = sphi 0, %s105
      %s107 = sphi 0, %s105
      %s108 = sphi 0, %s107
      %s122 = sphi 0, %s108
      %s126 = sphi 0, %s126
      %s128 = sphi 0, %s126
      %s129 = sphi 0, %s128
      %s143 = sphi 0, %s129
      %s151 = sphi 0, %s153
      %s154 = sphi 0, %s151
      %s155 = sphi 0, %s154
      %s171 = sphi 0, %s155
    $region4: #{tpu_custom_call.1} parent=1 // loop_header_branch
      %20 = sbr.rel (%p18) target = $region8
    $region5: #{tpu_custom_call.1} parent=1 // loop_body
      %s22 = ssub.s32 %s17, 1
      %s23 = ssub.s32 %s17, 2
      %s30 = sadd.s32 1, %s25
      %p31 = scmp.ge.s32.totalorder %s30, 1
      %s32 = scalar_select %p31, 0, %s30
      %s33 = sadd.s32 1, %s24
      %s34 = scalar_select %p31, %s33, %s24
      %p35 = scmp.ge.s32.totalorder %s34, 2
      %s36 = scalar_select %p35, 0, %s34
      %s37 = ssub.s32 %s24, %s36
      %p38 = scmp.eq.s32.totalorder %s37, 0
      %s40 = sadd.s32 %s39, 1
      %s41 = scalar_select %p38, %s39, %s40
      %p44 = pneg %p38
      %p45 = scmp.eq.s32.totalorder %s17, 1
      %p46 = por %p44, %p45
      %p47 = scmp.ne.s32.totalorder %s39, %s42
      %p48 = scmp.eq.s32.totalorder %s17, 0
      %p49 = por %p47, %p48
      %p50 = scmp.ne.s32.totalorder %s39, %s42
      %p51 = scmp.eq.s32.totalorder %s22, 1
      %p52 = por %p50, %p51
      %p53 = scmp.ne.s32.totalorder %s42, %s43
      %p54 = scmp.eq.s32.totalorder %s22, 0
      %p55 = por %p53, %p54
      %p56 = scmp.ne.s32.totalorder %s42, %s43
      %p57 = scmp.eq.s32.totalorder %s23, 1
      %p58 = por %p56, %p57
      %p60 = scmp.ne.s32.totalorder %s43, %s59
      %p61 = scmp.eq.s32.totalorder %s23, 0
      %p62 = por %p60, %p61
      %s64 = sadd.s32 %s63, 1
      %p67 = scmp.eq.s32.totalorder %s17, 1
      %p68 = scmp.ne.s32.totalorder %s63, %s65
      %p69 = scmp.eq.s32.totalorder %s17, 0
      %p70 = por %p68, %p69
      %p71 = scmp.ne.s32.totalorder %s63, %s65
      %p72 = scmp.eq.s32.totalorder %s22, 1
      %p73 = por %p71, %p72
      %p74 = scmp.ne.s32.totalorder %s65, %s66
      %p75 = scmp.eq.s32.totalorder %s22, 0
      %p76 = por %p74, %p75
      %p77 = scmp.ne.s32.totalorder %s65, %s66
      %p78 = scmp.eq.s32.totalorder %s23, 1
      %p79 = por %p77, %p78
      %p81 = scmp.ne.s32.totalorder %s66, %s80
      %p82 = scmp.eq.s32.totalorder %s23, 0
      %p83 = por %p81, %p82
      %s85 = sadd.s32 %s84, 1
      %p88 = scmp.eq.s32.totalorder %s17, 1
      %p89 = scmp.ne.s32.totalorder %s84, %s86
      %p90 = scmp.eq.s32.totalorder %s17, 0
      %p91 = por %p89, %p90
      %p92 = scmp.ne.s32.totalorder %s84, %s86
      %p93 = scmp.eq.s32.totalorder %s22, 1
      %p94 = por %p92, %p93
      %p95 = scmp.ne.s32.totalorder %s86, %s87
      %p96 = scmp.eq.s32.totalorder %s22, 0
      %p97 = por %p95, %p96
      %p98 = scmp.ne.s32.totalorder %s86, %s87
      %p99 = scmp.eq.s32.totalorder %s23, 1
      %p100 = por %p98, %p99
      %p102 = scmp.ne.s32.totalorder %s87, %s101
      %p103 = scmp.eq.s32.totalorder %s23, 0
      %p104 = por %p102, %p103
      %s106 = sadd.s32 %s105, 1
      %p109 = scmp.eq.s32.totalorder %s17, 1
      %p110 = scmp.ne.s32.totalorder %s105, %s107
      %p111 = scmp.eq.s32.totalorder %s17, 0
      %p112 = por %p110, %p111
      %p113 = scmp.ne.s32.totalorder %s105, %s107
      %p114 = scmp.eq.s32.totalorder %s22, 1
      %p115 = por %p113, %p114
      %p116 = scmp.ne.s32.totalorder %s107, %s108
      %p117 = scmp.eq.s32.totalorder %s22, 0
      %p118 = por %p116, %p117
      %p119 = scmp.ne.s32.totalorder %s107, %s108
      %p120 = scmp.eq.s32.totalorder %s23, 1
      %p121 = por %p119, %p120
      %p123 = scmp.ne.s32.totalorder %s108, %s122
      %p124 = scmp.eq.s32.totalorder %s23, 0
      %p125 = por %p123, %p124
      %s127 = sadd.s32 %s126, 1
      %p130 = scmp.eq.s32.totalorder %s17, 1
      %p131 = scmp.ne.s32.totalorder %s126, %s128
      %p132 = scmp.eq.s32.totalorder %s17, 0
      %p133 = por %p131, %p132
      %p134 = scmp.ne.s32.totalorder %s126, %s128
      %p135 = scmp.eq.s32.totalorder %s22, 1
      %p136 = por %p134, %p135
      %p137 = scmp.ne.s32.totalorder %s128, %s129
      %p138 = scmp.eq.s32.totalorder %s22, 0
      %p139 = por %p137, %p138
      %p140 = scmp.ne.s32.totalorder %s128, %s129
      %p141 = scmp.eq.s32.totalorder %s23, 1
      %p142 = por %p140, %p141
      %p144 = scmp.ne.s32.totalorder %s129, %s143
      %p145 = scmp.eq.s32.totalorder %s23, 0
      %p146 = por %p144, %p145
      %s147 = ssub.s32 %s24, %s36
      %s148 = ssub.s32 %s25, %s32
      %s149 = sor.u32 %s147, %s148
      %p150 = scmp.eq.s32.totalorder %s149, 0
      %s152 = sadd.s32 %s151, 1
      %s153 = scalar_select %p150, %s151, %s152
      %p156 = pneg %p150
      %p157 = scmp.eq.s32.totalorder %s17, 1
      %p158 = por %p156, %p157
      %p159 = scmp.ne.s32.totalorder %s151, %s154
      %p160 = scmp.eq.s32.totalorder %s17, 0
      %p161 = por %p159, %p160
      %p162 = scmp.ne.s32.totalorder %s151, %s154
      %p163 = scmp.eq.s32.totalorder %s22, 1
      %p164 = por %p162, %p163
      %p165 = scmp.ne.s32.totalorder %s154, %s155
      %p166 = scmp.eq.s32.totalorder %s22, 0
      %p167 = por %p165, %p166
      %p168 = scmp.ne.s32.totalorder %s154, %s155
      %p169 = scmp.eq.s32.totalorder %s23, 1
      %p170 = por %p168, %p169
      %p172 = scmp.ne.s32.totalorder %s155, %s171
      %p173 = scmp.eq.s32.totalorder %s23, 0
      %p174 = por %p172, %p173
      %p175 = scmp.le.s32.totalorder 1, %s17
      %p176 = scmp.lt.s32.totalorder %s17, 3
      %p177 = pnand %p175, %p176
      %p178 = pneg %p177
      // Predicated region
      $region9: #{tpu_custom_call.1} parent=5 // pred_check
        _
      $region10: #{tpu_custom_call.1} parent=5 // pred_check_branch
        %180 = sbr.rel (%p177) target = $region12
      $region11: #{tpu_custom_call.1} parent=5 // pred_region
        %s181 = ssub.s32 %s17, 1
        // Predicated region
        $region13: #{tpu_custom_call.1} parent=11 // pred_check
          %p182 = pneg %p76
        $region14: #{tpu_custom_call.1} parent=11 // pred_check_branch
          %184 = sbr.rel (%p182) target = $region16
        $region15: #{tpu_custom_call.1} parent=11 // pred_region
          _
        $region16: #{tpu_custom_call.1} parent=11 // pred_fallthru
          _
        // Predicated region
        $region17: #{tpu_custom_call.1} parent=11 // pred_check
          %p185 = pneg %p97
        $region18: #{tpu_custom_call.1} parent=11 // pred_check_branch
          %187 = sbr.rel (%p185) target = $region20
        $region19: #{tpu_custom_call.1} parent=11 // pred_region
          _
        $region20: #{tpu_custom_call.1} parent=11 // pred_fallthru
          _
        // Predicated region
        $region21: #{tpu_custom_call.1} parent=11 // pred_check
          %p188 = pneg %p118
        $region22: #{tpu_custom_call.1} parent=11 // pred_check_branch
          %190 = sbr.rel (%p188) target = $region24
        $region23: #{tpu_custom_call.1} parent=11 // pred_region
          _
        $region24: #{tpu_custom_call.1} parent=11 // pred_fallthru
          _
        // Predicated region
        $region25: #{tpu_custom_call.1} parent=11 // pred_check
          %p191 = pneg %p139
        $region26: #{tpu_custom_call.1} parent=11 // pred_check_branch
          %193 = sbr.rel (%p191) target = $region28
        $region27: #{tpu_custom_call.1} parent=11 // pred_region
          _
        $region28: #{tpu_custom_call.1} parent=11 // pred_fallthru
          _
      $region12: #{tpu_custom_call.1} parent=5 // pred_fallthru
        _
      %p194 = scmp.lt.s32.totalorder %s17, 2
      // Predicated region
      $region29: #{tpu_custom_call.1} parent=5 // pred_check
        %p195 = pneg %p194
      $region30: #{tpu_custom_call.1} parent=5 // pred_check_branch
        %197 = sbr.rel (%p195) target = $region32
      $region31: #{tpu_custom_call.1} parent=5 // pred_region
        // Predicated region
        $region33: #{tpu_custom_call.1} parent=31 // pred_check
          %p198 = pneg %p49
        $region34: #{tpu_custom_call.1} parent=31 // pred_check_branch
          %200 = sbr.rel (%p198) target = $region36
        $region35: #{tpu_custom_call.1} parent=31 // pred_region
          %s201 = sand.u32 %s39, 1
          %s202 = scalar_lea.sflag [#allocation3], %s201
          %s203 = sand.u32 %s39, 1
          %s204 = smul.addr %s203, 24
          %s205 = scalar_lea.vmem [#allocation2], %s204
          %s207 = ssub.s32 384, 384
          %208 = vsyncadd %s202, %s207
          %s209 = smul.addr %s24, 3
          %s210 = smul.addr %s209, 128
          %s211 = scalar_lea.hbm %s0, %s210
          %s213 = sshll.u32 %s205, 4
          %s214 = int_to_ptr.vmem [resolvable:$true] %s213
          %216 = dma.hbm_to_vmem [thread:$0]  %s211, 384, %s214, %s202
        $region36: #{tpu_custom_call.1} parent=31 // pred_fallthru
          _
      $region32: #{tpu_custom_call.1} parent=5 // pred_fallthru
        _
      %p217 = scmp.le.s32.totalorder 1, %s17
      %p218 = scmp.lt.s32.totalorder %s17, 3
      %p219 = pnand %p217, %p218
      %p220 = pneg %p219
      // Predicated region
      $region37: #{tpu_custom_call.1} parent=5 // pred_check
        _
      $region38: #{tpu_custom_call.1} parent=5 // pred_check_branch
        %222 = sbr.rel (%p219) target = $region40
      $region39: #{tpu_custom_call.1} parent=5 // pred_region
        %s223 = ssub.s32 %s17, 1
        %s224 = sand.u32 %s42, 1
        %s225 = scalar_lea.sflag [#allocation3], %s224
        %s226 = sand.u32 %s42, 1
        %s227 = smul.addr %s226, 24
        %s228 = scalar_lea.vmem [#allocation2], %s227
        // Predicated region
        $region41: #{tpu_custom_call.1} parent=39 // pred_check
          %p229 = pneg %p55
        $region42: #{tpu_custom_call.1} parent=39 // pred_check_branch
          %231 = sbr.rel (%p229) target = $region44
        $region43: #{tpu_custom_call.1} parent=39 // pred_region
          %232 = dma.done %s225, 384
        $region44: #{tpu_custom_call.1} parent=39 // pred_fallthru
          _
        %s233 = sand.u32 %s42, 1
        %s234 = scalar_lea.sflag [#allocation3], %s233
        %s235 = sand.u32 %s42, 1
        %s236 = smul.addr %s235, 24
        %s237 = scalar_lea.vmem [#allocation2], %s236
        %p238 = pneg %p55
        %p239 = pneg %p52
        %p240 = pneg %p76
        %p241 = pneg %p73
        %p242 = pneg %p97
        %p243 = pneg %p94
        %p244 = pneg %p118
        %p245 = pneg %p115
        %p246 = pneg %p139
        %p247 = pneg %p136
        %p248 = pneg %p167
        %p249 = pneg %p164
        %s250 = sand.u32 %s154, 1
        %s251 = scalar_lea.sflag [#allocation4], %s250
        %s252 = sand.u32 %s154, 1
        %s253 = smul.addr %s252, 8
        %s254 = scalar_lea.vmem [#allocation5], %s253
        %s255 = smul.u32 2, %s27
        %v256 = vld [vmem:[%s228] sm:$0xff]
        %v257 = vld [vmem:[%s228 + $0x8] sm:$0xff]
        %v258 = vld [vmem:[%s228 + $0x10] sm:$0xff]
        %v259 = vlaneseq
        %v260 = vand.u32 %v259, 127
        %v261 = vadd.s32 %v260, 128
        %vm262 = vcmp.lt.s32.totalorder %v260, 0
        %v263 = vsub.s32 0, %v260
        %v264 = vsel %vm262, %v263, %v260
        %v265 = vshrl.u32 %v264, 4
        %v266 = vand.u32 %v264, 15
        %v267 = vsub.s32 0, %v266
        %v268 = vsel %vm262, %v267, %v266
        %vm269 = vcmp.lt.s32.totalorder %v261, 0
        %v270 = vsub.s32 0, %v261
        %v271 = vsel %vm269, %v270, %v261
        %v272 = vshrl.u32 %v271, 4
        %v273 = vand.u32 %v271, 15
        %v274 = vsub.s32 0, %v273
        %v275 = vsel %vm269, %v274, %v273
        %vm276 = vcmp.ne.s32.totalorder %v268, 0
        %vm277 = vcmp.ne.s32.totalorder %v275, 0
        %vm278 = vcmp.lt.s32.totalorder %v268, 0
        %vm279 = vcmp.lt.s32.totalorder %v275, 0
        %vm280 = vmand %vm278, %vm276
        %vm281 = vmand %vm279, %vm277
        %v282 = vadd.s32 %v268, 16
        %v283 = vadd.s32 %v275, 16
        %v284 = vsel %vm280, %v282, %v268
        %v285 = vsel %vm281, %v283, %v275
        %vm286 = vcmp.gt.s32.totalorder %v284, 0
        %vm287 = vcmp.gt.s32.totalorder %v285, 0
        %vm288 = vcmp.lt.s32.totalorder %v284, 15
        %vm289 = vcmp.lt.s32.totalorder %v285, 15
        %290 = vrot.lane.b32.xlu0 %v256, 1
        %v291 = vpop.permute.xlu0 %290
        %292 = vrot.lane.b32.xlu0 %v257, 1
        %v293 = vpop.permute.xlu0 %292
        %294 = vrot.lane.b32.xlu0 %v258, 1
        %v295 = vpop.permute.xlu0 %294
        %vm296 = vcmp.lt.s32.totalorder %v260, 1
        %v297 = vsel %vm296, %v291, %v293
        %v298 = vsel %vm296, %v295, %v291
        %v299 = vsel %vm286, 1, 0
        %v300 = vsel %vm287, 1, 0
        %vm301 = vcmp.eq.s32.totalorder %v299, 1
        %vm302 = vcmp.eq.s32.totalorder %v300, 1
        %v303 = vsel %vm301, %v298, 0.0
        %v304 = vsel %vm302, %v297, 0.0
        %305 = vrot.lane.b32.xlu0 %v256, 127
        %v306 = vpop.permute.xlu0 %305
        %307 = vrot.lane.b32.xlu0 %v257, 127
        %v308 = vpop.permute.xlu0 %307
        %309 = vrot.lane.b32.xlu0 %v258, 127
        %v310 = vpop.permute.xlu0 %309
        %vm311 = vcmp.lt.s32.totalorder %v260, 127
        %v312 = vsel %vm311, %v308, %v310
        %v313 = vsel %vm311, %v306, %v308
        %v314 = vsel %vm288, 1, 0
        %v315 = vsel %vm289, 1, 0
        %vm316 = vcmp.eq.s32.totalorder %v314, 1
        %vm317 = vcmp.eq.s32.totalorder %v315, 1
        %v318 = vsel %vm316, %v313, 0.0
        %v319 = vsel %vm317, %v312, 0.0
        %320 = vrot.lane.b32.xlu0 %v256, 113
        %v321 = vpop.permute.xlu0 %320
        %322 = vrot.lane.b32.xlu0 %v257, 113
        %v323 = vpop.permute.xlu0 %322
        %324 = vrot.lane.b32.xlu0 %v258, 113
        %v325 = vpop.permute.xlu0 %324
        %vm326 = vcmp.lt.s32.totalorder %v260, 113
        %v327 = vsel %vm326, %v323, %v325
        %v328 = vsel %vm326, %v321, %v323
        %v329 = vsel %vm301, %v328, 0.0
        %v330 = vsel %vm302, %v327, 0.0
        %331 = vrot.lane.b32.xlu0 %v256, 112
        %v332 = vpop.permute.xlu0 %331
        %333 = vrot.lane.b32.xlu0 %v257, 112
        %v334 = vpop.permute.xlu0 %333
        %335 = vrot.lane.b32.xlu0 %v258, 112
        %v336 = vpop.permute.xlu0 %335
        %vm337 = vcmp.lt.s32.totalorder %v260, 112
        %v338 = vsel %vm337, %v334, %v336
        %v339 = vsel %vm337, %v332, %v334
        %340 = vrot.lane.b32.xlu0 %v256, 111
        %v341 = vpop.permute.xlu0 %340
        %342 = vrot.lane.b32.xlu0 %v257, 111
        %v343 = vpop.permute.xlu0 %342
        %344 = vrot.lane.b32.xlu0 %v258, 111
        %v345 = vpop.permute.xlu0 %344
        %vm346 = vcmp.lt.s32.totalorder %v260, 111
        %v347 = vsel %vm346, %v343, %v345
        %v348 = vsel %vm346, %v341, %v343
        %v349 = vsel %vm316, %v348, 0.0
        %v350 = vsel %vm317, %v347, 0.0
        %351 = vrot.lane.b32.xlu0 %v256, 97
        %v352 = vpop.permute.xlu0 %351
        %353 = vrot.lane.b32.xlu0 %v257, 97
        %v354 = vpop.permute.xlu0 %353
        %355 = vrot.lane.b32.xlu0 %v258, 97
        %v356 = vpop.permute.xlu0 %355
        %vm357 = vcmp.lt.s32.totalorder %v260, 97
        %v358 = vsel %vm357, %v354, %v356
        %v359 = vsel %vm357, %v352, %v354
        %v360 = vsel %vm301, %v359, 0.0
        %v361 = vsel %vm302, %v358, 0.0
        %362 = vrot.lane.b32.xlu0 %v256, 96
        %v363 = vpop.permute.xlu0 %362
        %364 = vrot.lane.b32.xlu0 %v257, 96
        %v365 = vpop.permute.xlu0 %364
        %366 = vrot.lane.b32.xlu0 %v258, 96
        %v367 = vpop.permute.xlu0 %366
        %vm368 = vcmp.lt.s32.totalorder %v260, 96
        %v369 = vsel %vm368, %v365, %v367
        %v370 = vsel %vm368, %v363, %v365
        %371 = vrot.lane.b32.xlu0 %v256, 95
        %v372 = vpop.permute.xlu0 %371
        %373 = vrot.lane.b32.xlu0 %v257, 95
        %v374 = vpop.permute.xlu0 %373
        %375 = vrot.lane.b32.xlu0 %v258, 95
        %v376 = vpop.permute.xlu0 %375
        %vm377 = vcmp.lt.s32.totalorder %v260, 95
        %v378 = vsel %vm377, %v374, %v376
        %v379 = vsel %vm377, %v372, %v374
        %v380 = vsel %vm316, %v379, 0.0
        %v381 = vsel %vm317, %v378, 0.0
        %v382 = vld [vmem:[%s1] sm:$0xff]
        %v383 = vld [vmem:[%s1 + $0x8] sm:$0xff]
        %v384 = vld [vmem:[%s1 + $0x10] sm:$0xff]
        %v385 = vld [vmem:[%s2] sm:$0xff]
        %v386 = vld [vmem:[%s2 + $0x8] sm:$0xff]
        %v387 = vld [vmem:[%s2 + $0x10] sm:$0xff]
        %389 = vset.pattern.permute.xlu0 0
        %390 = vperm.xlu0 %389, %v385
        %v391 = vpop.permute.xlu0 %390
        %394 = vset.pattern.permute.xlu0 0
        %395 = vperm.xlu0 %394, %v386
        %v396 = vpop.permute.xlu0 %395
        %399 = vset.pattern.permute.xlu0 0
        %400 = vperm.xlu0 %399, %v387
        %v401 = vpop.permute.xlu0 %400
        %vm403 = vcmask 588800
        %v405 = vsel %vm403, %v382, 0
        %v408 = vsel %vm403, %v383, 0
        %v411 = vsel %vm403, %v384, 0
        %413 = vmatprep.subr.mxu0 0.0
        %414 = vmatpush1.msra.mxu0 0.0
        %415 = vmatprep.subr.mxu0 0.0
        %416 = vmatpush1.msra.mxu0 0.0
        %417 = vmatprep.subr.mxu0 0.0
        %418 = vmatpush1.msra.mxu0 0.0
        %419 = vmatprep.subr.mxu0 0.0
        %420 = vmatpush1.msra.mxu0 0.0
        %421 = vmatprep.subr.mxu0 0.0
        %422 = vmatpush1.msra.mxu0 0.0
        %423 = vmatprep.subr.mxu0 0.0
        %424 = vmatpush1.msra.mxu0 0.0
        %425 = vmatprep.subr.mxu0 0.0
        %426 = vmatpush1.msra.mxu0 0.0
        %427 = vmatprep.subr.mxu0 %v381
        %428 = vmatpush1.msra.mxu0 %v380
        %429 = vmatprep.subr.mxu0 %v369
        %430 = vmatpush1.msra.mxu0 %v370
        %431 = vmatprep.subr.mxu0 %v361
        %432 = vmatpush1.msra.mxu0 %v360
        %433 = vmatprep.subr.mxu0 %v350
        %434 = vmatpush1.msra.mxu0 %v349
        %435 = vmatprep.subr.mxu0 %v338
        %436 = vmatpush1.msra.mxu0 %v339
        %437 = vmatprep.subr.mxu0 %v330
        %438 = vmatpush1.msra.mxu0 %v329
        %439 = vmatprep.subr.mxu0 %v319
        %440 = vmatpush1.msra.mxu0 %v318
        %441 = vmatprep.subr.mxu0 %v257
        %442 = vmatpush1.msra.mxu0 %v256
        %443 = vmatprep.subr.mxu0 %v304
        %444 = vmatpush1.msra.mxu0 %v303
        %445 = vmatprep.subr.mxu0 0.0
        %446 = vmatpush2.msra.mxu0 0.0
        %447 = vmatprep.subr.mxu0 0.0
        %448 = vmatpush2.msra.mxu0 0.0
        %449 = vmatprep.subr.mxu0 0.0
        %450 = vmatpush2.msra.mxu0 0.0
        %451 = vmatprep.subr.mxu0 0.0
        %452 = vmatpush2.msra.mxu0 0.0
        %453 = vmatprep.subr.mxu0 0.0
        %454 = vmatpush2.msra.mxu0 0.0
        %455 = vmatprep.subr.mxu0 0.0
        %456 = vmatpush2.msra.mxu0 0.0
        %457 = vmatprep.subr.mxu0 0.0
        %458 = vmatpush2.msra.mxu0 0.0
        %459 = vmatprep.subr.mxu0 0.0
        %460 = vmatpush2.msra.mxu0 0.0
        %461 = vmatprep.subr.mxu0 0.0
        %462 = vmatpush2.msra.mxu0 0.0
        %463 = vmatprep.subr.mxu0 0.0
        %464 = vmatpush2.msra.mxu0 0.0
        %465 = vmatprep.subr.mxu0 0.0
        %466 = vmatpush2.msra.mxu0 0.0
        %467 = vmatprep.subr.mxu0 0.0
        %468 = vmatpush2.msra.mxu0 0.0
        %469 = vmatprep.subr.mxu0 0.0
        %470 = vmatpush2.msra.mxu0 0.0
        %471 = vmatprep.subr.mxu0 0.0
        %472 = vmatpush2.msra.mxu0 0.0
        %473 = vmatprep.subr.mxu0 0.0
        %474 = vmatpush2.msra.mxu0 0.0
        %475 = vmatprep.subr.mxu0 0.0
        %476 = vmatpush2.msra.mxu0 0.0
        %477 = vmatprep.mubr.f32.mxu0 0.0
        %478 = vmatmul.mubr.f32.gmra.mxu0 %v405
        %v479 = vpop.f32.mrf.mxu0
        %v480 = vadd.f32 %v391, %v479
        %v481 = vpop.f32.mrf.mxu0
        %v482 = vadd.f32 %v391, %v481
        %483 = vmatprep.mubr.f32.mxu0 0.0
        %484 = vmatmul.mubr.f32.gmra.mxu0 %v408
        %v485 = vpop.f32.mrf.mxu0
        %v486 = vadd.f32 %v396, %v485
        %v487 = vpop.f32.mrf.mxu0
        %v488 = vadd.f32 %v396, %v487
        %489 = vmatprep.mubr.f32.mxu0 0.0
        %490 = vmatmul.mubr.f32.gmra.mxu0 %v411
        %v491 = vpop.f32.mrf.mxu0
        %v492 = vadd.f32 %v401, %v491
        %v493 = vpop.f32.mrf.mxu0
        %v494 = vadd.f32 %v401, %v493
        %495 = vdwg.mxu0
        %v496 = vmax.f32 %v480, 0.0
        %v497 = vmax.f32 %v482, 0.0
        %v498 = vmax.f32 %v486, 0.0
        %v499 = vmax.f32 %v488, 0.0
        %v500 = vmax.f32 %v492, 0.0
        %v501 = vmax.f32 %v494, 0.0
        %v502 = vmin.f32 %v496, 6.0
        %v503 = vmin.f32 %v497, 6.0
        %v504 = vmin.f32 %v498, 6.0
        %v505 = vmin.f32 %v499, 6.0
        %v506 = vmin.f32 %v500, 6.0
        %v507 = vmin.f32 %v501, 6.0
        %v508 = vld [vmem:[%s3] sm:$0xff]
        %v509 = vld [vmem:[%s4] sm:$0xff]
        %511 = vset.pattern.permute.xlu0 0
        %512 = vperm.xlu0 %511, %v509
        %v513 = vpop.permute.xlu0 %512
        %vm515 = vcmask 195584
        %v517 = vsel %vm515, %v508, 0
        %519 = vmatprep.subr.mxu0 0.0
        %520 = vmatpush1.msra.mxu0 0.0
        %521 = vmatprep.subr.mxu0 0.0
        %522 = vmatpush1.msra.mxu0 0.0
        %523 = vmatprep.subr.mxu0 0.0
        %524 = vmatpush1.msra.mxu0 0.0
        %525 = vmatprep.subr.mxu0 0.0
        %526 = vmatpush1.msra.mxu0 0.0
        %527 = vmatprep.subr.mxu0 0.0
        %528 = vmatpush1.msra.mxu0 0.0
        %529 = vmatprep.subr.mxu0 0.0
        %530 = vmatpush1.msra.mxu0 0.0
        %531 = vmatprep.subr.mxu0 0.0
        %532 = vmatpush1.msra.mxu0 0.0
        %533 = vmatprep.subr.mxu0 0.0
        %534 = vmatpush1.msra.mxu0 0.0
        %535 = vmatprep.subr.mxu0 0.0
        %536 = vmatpush1.msra.mxu0 0.0
        %537 = vmatprep.subr.mxu0 0.0
        %538 = vmatpush1.msra.mxu0 0.0
        %539 = vmatprep.subr.mxu0 0.0
        %540 = vmatpush1.msra.mxu0 0.0
        %541 = vmatprep.subr.mxu0 0.0
        %542 = vmatpush1.msra.mxu0 0.0
        %543 = vmatprep.subr.mxu0 0.0
        %544 = vmatpush1.msra.mxu0 0.0
        %545 = vmatprep.subr.mxu0 %v507
        %546 = vmatpush1.msra.mxu0 %v506
        %547 = vmatprep.subr.mxu0 %v505
        %548 = vmatpush1.msra.mxu0 %v504
        %549 = vmatprep.subr.mxu0 %v503
        %550 = vmatpush1.msra.mxu0 %v502
        %551 = vmatprep.subr.mxu0 0.0
        %552 = vmatpush2.msra.mxu0 0.0
        %553 = vmatprep.subr.mxu0 0.0
        %554 = vmatpush2.msra.mxu0 0.0
        %555 = vmatprep.subr.mxu0 0.0
        %556 = vmatpush2.msra.mxu0 0.0
        %557 = vmatprep.subr.mxu0 0.0
        %558 = vmatpush2.msra.mxu0 0.0
        %559 = vmatprep.subr.mxu0 0.0
        %560 = vmatpush2.msra.mxu0 0.0
        %561 = vmatprep.subr.mxu0 0.0
        %562 = vmatpush2.msra.mxu0 0.0
        %563 = vmatprep.subr.mxu0 0.0
        %564 = vmatpush2.msra.mxu0 0.0
        %565 = vmatprep.subr.mxu0 0.0
        %566 = vmatpush2.msra.mxu0 0.0
        %567 = vmatprep.subr.mxu0 0.0
        %568 = vmatpush2.msra.mxu0 0.0
        %569 = vmatprep.subr.mxu0 0.0
        %570 = vmatpush2.msra.mxu0 0.0
        %571 = vmatprep.subr.mxu0 0.0
        %572 = vmatpush2.msra.mxu0 0.0
        %573 = vmatprep.subr.mxu0 0.0
        %574 = vmatpush2.msra.mxu0 0.0
        %575 = vmatprep.subr.mxu0 0.0
        %576 = vmatpush2.msra.mxu0 0.0
        %577 = vmatprep.subr.mxu0 0.0
        %578 = vmatpush2.msra.mxu0 0.0
        %579 = vmatprep.subr.mxu0 0.0
        %580 = vmatpush2.msra.mxu0 0.0
        %581 = vmatprep.subr.mxu0 0.0
        %582 = vmatpush2.msra.mxu0 0.0
        %583 = vmatprep.mubr.f32.mxu0 0.0
        %584 = vmatmul.mubr.f32.gmra.mxu0 %v517
        %v585 = vpop.f32.mrf.mxu0
        %v586 = vadd.f32 %v513, %v585
        %v587 = vpop.f32.mrf.mxu0
        %v588 = vadd.f32 %v513, %v587
        %589 = vdwg.mxu0
        %v592 = vcombine.low %v586, %v588
        %594 = vst [vmem:[%s254] sm:$0xff] %v592
        %s595 = sand.u32 %s154, 1
        %s596 = scalar_lea.sflag [#allocation4], %s595
        %s597 = sand.u32 %s154, 1
        %s598 = smul.addr %s597, 8
        %s599 = scalar_lea.vmem [#allocation5], %s598
        // Predicated region
        $region45: #{tpu_custom_call.1} parent=39 // pred_check
          %p600 = pneg %p164
        $region46: #{tpu_custom_call.1} parent=39 // pred_check_branch
          %602 = sbr.rel (%p600) target = $region48
        $region47: #{tpu_custom_call.1} parent=39 // pred_region
          %s603 = smul.u32 2, %s27
          %s605 = ssub.s32 128, 128
          %606 = vsyncadd %s596, %s605
          %s607 = smul.addr %s26, 2
          %s608 = sadd.s32 %s603, %s607
          %s609 = smul.addr %s608, 64
          %s610 = scalar_lea.hbm %s5, %s609
          %s612 = sshll.u32 %s599, 4
          %s613 = int_to_ptr.vmem [resolvable:$true] %s612
          %615 = dma.vmem_to_hbm [thread:$0]  %s613, 128, %s610, %s596
        $region48: #{tpu_custom_call.1} parent=39 // pred_fallthru
          _
      $region40: #{tpu_custom_call.1} parent=5 // pred_fallthru
        _
      %p616 = scmp.le.s32.totalorder 2, %s17
      // Predicated region
      $region49: #{tpu_custom_call.1} parent=5 // pred_check
        %p617 = pneg %p616
      $region50: #{tpu_custom_call.1} parent=5 // pred_check_branch
        %619 = sbr.rel (%p617) target = $region52
      $region51: #{tpu_custom_call.1} parent=5 // pred_region
        %s620 = ssub.s32 %s17, 2
        // Predicated region
        $region53: #{tpu_custom_call.1} parent=51 // pred_check
          %p621 = pneg %p170
        $region54: #{tpu_custom_call.1} parent=51 // pred_check_branch
          %623 = sbr.rel (%p621) target = $region56
        $region55: #{tpu_custom_call.1} parent=51 // pred_region
          %s624 = sand.u32 %s155, 1
          %s625 = scalar_lea.sflag [#allocation4], %s624
          %s626 = sand.u32 %s155, 1
          %s627 = smul.addr %s626, 8
          %s628 = scalar_lea.vmem [#allocation5], %s627
          %629 = dma.done %s625, 128
        $region56: #{tpu_custom_call.1} parent=51 // pred_fallthru
          _
      $region52: #{tpu_custom_call.1} parent=5 // pred_fallthru
        _
    $region6: #{tpu_custom_call.1} parent=1 // loop_footer
      %s21 = sadd.s32 1, %s17
    $region7: #{tpu_custom_call.1} parent=1 // loop_footer_branch
      %16 = sbr.rel target = $region3
    $region8: #{tpu_custom_call.1} parent=1 // loop_exit
      _
    %630 = vsyncpa [#allocation3], 1
    %s631 = scalar_lea.sflag [#allocation3], 1
    %632 = vsyncpa %s631, 1
    %633 = vsyncpa [#allocation4], 1
    %s634 = scalar_lea.sflag [#allocation4], 1
    %635 = vsyncpa %s634, 1

</llo_original>
